<compile_context>
chip_gen: v7x
topology: tpu7x:2x2x1
jax: 0.10.0
libtpu: 0.0.40
codegen_flags: <defaults>
</compile_context>

<pallas_src>
import jax
import jax.numpy as jnp
from jax.experimental import pallas as pl
from jax.experimental.pallas import tpu as pltpu

_LANE = 128
_F32 = 4


def _vmem_capacity_bytes():
    try:
        cap = int(pltpu.get_tpu_info().vmem_capacity_bytes)
        if cap > 0:
            return cap
    except Exception:
        pass
    return 64 * 1024 * 1024  # conservative default (v7x per-TC VMEM)


def _vmem_budgets():
    cap = _vmem_capacity_bytes()
    if cap >= 96 * 1024 * 1024:      # 128 MiB parts (v5e / v6e)
        budget = cap // 2            # ~64 MiB of blocks + scratch
    else:                            # 64 MiB parts (v7x per TC)
        budget = (cap * 3) // 8      # ~24 MiB
    limit = min(budget + cap // 4, cap - 8 * 1024 * 1024)   # ~96 / ~40 MiB
    return budget, limit


def _num_tensorcores_per_chip():
    """Heuristic: only dual-TC / megacore parts benefit from a parallel split."""
    try:
        kind = jax.devices()[0].device_kind.lower()
    except Exception:
        return 1
    if ("v7" in kind) or ("v5p" in kind) or ("v4" in kind):
        return 2
    return 1


def _footprint(bB, C, tt, mel_bytes, gate_bytes):
    """VMEM high-water estimate for one grid step."""
    blocks = 2 * (3 * bB * C * tt * mel_bytes + 2 * bB * tt * gate_bytes)  # dbl-buffered
    interm = 3 * bB * C * tt * _F32     # d1/d2/sq + bf16->f32 cast temporaries
    accs = 2 * bB * tt * _F32           # accumulators
    return blocks + interm + accs


def _choose_tiles(B, C, T, mel_bytes, gate_bytes, budget, multi_tc, max_time_tile):
    """Pick (nB, bB, tT).  Gate 2-D BlockSpec needs bB == B or bB % 8 == 0."""
    nB, bB = 1, B
    if multi_tc and B % 2 == 0 and (B // 2) % 8 == 0:
        nB, bB = 2, B // 2
    # TODO(synk): on dual-TC chips with odd/small B, a 2-way *time* split
    # (partial rows summed in the wrapper) would keep both cores busy.

    def pick_tt(bb):
        # Full-T fast path: no time loop, no ragged masking.
        if T <= max_time_tile and _footprint(bb, C, T, mel_bytes, gate_bytes) <= budget:
            return T
        for cand in (2048, 1024, 512, 384, 256, 128):
            if (cand <= max_time_tile and cand < T
                    and _footprint(bb, C, cand, mel_bytes, gate_bytes) <= budget):
                return cand
        return None

    while True:
        tt = pick_tt(bB)
        if tt is not None:
            return nB, bB, tt
        if bB % 2 == 0 and (bB // 2) % 8 == 0:   # shrink batch block, specs stay legal
            nB, bB = nB * 2, bB // 2
        else:
            return nB, bB, _LANE                 # last resort


def _make_kernel(pw, tT, T_true, needs_mask, inv_ct, inv_t):
    def kernel(mel_out_ref, mel_post_ref, mel_tgt_ref,
               gate_out_ref, gate_tgt_ref,
               mel_lb_ref, gate_lb_ref,
               acc_mel, acc_gate):
        t = pl.program_id(1)
        last_t = pl.num_programs(1) - 1

        @pl.when(t == 0)
        def _():
            acc_mel[...] = jnp.zeros_like(acc_mel)
            acc_gate[...] = jnp.zeros_like(acc_gate)

        # ---- mel MSE: both branches fused, cheap C (sublane) reduce per tile ----
        mt = mel_tgt_ref[...].astype(jnp.float32)           # (bB, C, tT)
        d1 = mel_out_ref[...].astype(jnp.float32) - mt
        d2 = mel_post_ref[...].astype(jnp.float32) - mt
        sq_sum = jnp.sum(d1 * d1 + d2 * d2, axis=1)         # (bB, tT)

        # ---- gate BCE-with-logits (numerically stable, pos_weight) ----
        go = gate_out_ref[...].astype(jnp.float32)           # (bB, tT)
        gt = gate_tgt_ref[...].astype(jnp.float32)
        sp = jnp.maximum(-go, 0.0) + jnp.log1p(jnp.exp(-jnp.abs(go)))
        bce = (1.0 - gt) * go + (1.0 + (pw - 1.0) * gt) * sp

        if needs_mask:  # static: only the ragged last block needs the mask
            @pl.when(t != last_t)
            def _():
                acc_mel[...] += sq_sum
                acc_gate[...] += bce

            @pl.when(t == last_t)
            def _():
                lane = jax.lax.broadcasted_iota(jnp.int32, (1, tT), 1) + t * tT
                valid = lane < T_true
                acc_mel[...] += jnp.where(valid, sq_sum, 0.0)
                acc_gate[...] += jnp.where(valid, bce, 0.0)
        else:
            acc_mel[...] += sq_sum
            acc_gate[...] += bce

        # Final lane (time) reduction happens exactly once.
        @pl.when(t == last_t)
        def _():
            mel_lb = jnp.sum(acc_mel[...], axis=1, keepdims=True) * inv_ct   # (bB, 1)
            gate_lb = jnp.sum(acc_gate[...], axis=1, keepdims=True) * inv_t  # (bB, 1)
            mel_lb_ref[...] = mel_lb[None]                                   # (1, bB, 1)
            gate_lb_ref[...] = gate_lb[None]

    return kernel


def tacotron2_loss(model_output, target, pos_weight=None, max_time_tile=4096):
    mel_out = model_output["mel_outputs"]            # (B, C, T)
    mel_post = model_output["mel_outputs_postnet"]   # (B, C, T)
    gate_out = model_output["gate_predicted"]        # (B, T)
    mel_tgt = target["mel_padded"]                   # (B, C, T)
    gate_tgt = target["gate_target"]                 # (B, T)

    B, C, T = mel_out.shape
    pw = 1.0 if pos_weight is None else float(pos_weight)

    mel_bytes = jnp.dtype(mel_out.dtype).itemsize
    gate_bytes = jnp.dtype(gate_out.dtype).itemsize

    budget, vmem_limit = _vmem_budgets()
    multi_tc = _num_tensorcores_per_chip() > 1
    nB, bB, tT = _choose_tiles(B, C, T, mel_bytes, gate_bytes, budget,
                               multi_tc, max_time_tile)
    nT = -(-T // tT)
    needs_mask = (T % tT) != 0            # ragged last block, masked in-kernel

    inv_ct = 1.0 / float(C * T)           # true divisors, never the padded length
    inv_t = 1.0 / float(T)

    mel_spec = pl.BlockSpec((bB, C, tT), lambda b, t: (b, 0, t))
    gate_spec = pl.BlockSpec((bB, tT), lambda b, t: (b, t))
    out_spec = pl.BlockSpec((1, bB, 1), lambda b, t: (b, 0, 0))

    cost = pl.CostEstimate(
        flops=6 * B * C * T + 12 * B * T,
        transcendentals=2 * B * T,
        bytes_accessed=3 * B * C * T * mel_bytes + 2 * B * T * gate_bytes + 2 * B * 4,
    )

    kernel = _make_kernel(pw, tT, T, needs_mask, inv_ct, inv_t)
    mel_lb_out, gate_lb_out = pl.pallas_call(
        kernel,
        grid=(nB, nT),
        in_specs=[mel_spec, mel_spec, mel_spec, gate_spec, gate_spec],
        out_specs=(out_spec, out_spec),
        out_shape=(jax.ShapeDtypeStruct((nB, bB, 1), jnp.float32),
                   jax.ShapeDtypeStruct((nB, bB, 1), jnp.float32)),
        scratch_shapes=[pltpu.VMEM((bB, tT), jnp.float32),
                        pltpu.VMEM((bB, tT), jnp.float32)],
        compiler_params=pltpu.CompilerParams(
            dimension_semantics=("parallel", "arbitrary"),
            vmem_limit_bytes=int(vmem_limit)),
        cost_estimate=cost,
    )(mel_out, mel_post, mel_tgt, gate_out, gate_tgt)

    mel_lb = mel_lb_out.reshape(B)
    gate_lb = gate_lb_out.reshape(B)
    mel_loss = jnp.mean(mel_lb)    # scalar means in the wrapper (no (1,1) outputs)
    gate_loss = jnp.mean(gate_lb)
    return mel_loss, gate_loss, mel_lb, gate_lb


def _reference(model_output, target, pos_weight):
    mel_out = model_output["mel_outputs"].astype(jnp.float32)
    mel_post = model_output["mel_outputs_postnet"].astype(jnp.float32)
    gate_out = model_output["gate_predicted"].astype(jnp.float32)
    mel_tgt = target["mel_padded"].astype(jnp.float32)
    gate_tgt = target["gate_target"].astype(jnp.float32)
    pw = 1.0 if pos_weight is None else float(pos_weight)

    mel_lb = (jnp.mean((mel_out - mel_tgt) ** 2, axis=(1, 2))
              + jnp.mean((mel_post - mel_tgt) ** 2, axis=(1, 2)))
    mel_loss = jnp.mean(mel_lb)
    sp = jnp.maximum(-gate_out, 0.0) + jnp.log1p(jnp.exp(-jnp.abs(gate_out)))
    bce = (1.0 - gate_tgt) * gate_out + (1.0 + (pw - 1.0) * gate_tgt) * sp
    gate_lb = jnp.mean(bce, axis=1)
    gate_loss = jnp.mean(gate_lb)
    return mel_loss, gate_loss, mel_lb, gate_lb


def _make_inputs(key, B, C, T):
    k1, k2, k3, k4, k5 = jax.random.split(key, 5)
    model_output = {
        "mel_outputs": jax.random.normal(k1, (B, C, T), dtype=jnp.float32),
        "mel_outputs_postnet": jax.random.normal(k2, (B, C, T), dtype=jnp.float32),
        "gate_predicted": jax.random.normal(k3, (B, T), dtype=jnp.float32) * 2.0,
    }
    target = {
        "mel_padded": jax.random.normal(k4, (B, C, T), dtype=jnp.float32),
        "gate_target": (jax.random.uniform(k5, (B, T)) > 0.5).astype(jnp.float32),
    }
    return model_output, target


if __name__ == "__main__":
    key = jax.random.PRNGKey(0)
    k_a, k_b = jax.random.split(key)

    # Test 1: small shapes, full-T fast path, pos_weight set.
    mo1, tg1 = _make_inputs(k_a, B=2, C=8, T=16)
    outs1 = jax.block_until_ready(tacotron2_loss(mo1, tg1, pos_weight=5.0))
    ref1 = _reference(mo1, tg1, 5.0)
    for got, want in zip(outs1, ref1):
        assert jnp.allclose(got, want, rtol=1e-5, atol=1e-5), (got, want)

    # Test 2: forces the tiled time grid (tT=128 -> 3 steps) with a ragged last
    # block masked in-kernel (no wrapper padding), pos_weight=None.
    mo2, tg2 = _make_inputs(k_b, B=2, C=8, T=300)
    outs2 = jax.block_until_ready(
        tacotron2_loss(mo2, tg2, pos_weight=None, max_time_tile=128))
    ref2 = _reference(mo2, tg2, None)
    for got, want in zip(outs2, ref2):
        assert jnp.allclose(got, want, rtol=1e-5, atol=1e-5), (got, want)

    print("KERNEL_OK")
</pallas_src>

<mosaic_0001>
module attributes {stable_mosaic.version = 11 : i64} {
  func.func @kernel(%arg0: i32, %arg1: i32, %arg2: memref<2x8x16xf32, #tpu.memory_space<vmem>>, %arg3: memref<2x8x16xf32, #tpu.memory_space<vmem>>, %arg4: memref<2x8x16xf32, #tpu.memory_space<vmem>>, %arg5: memref<2x16xf32, #tpu.memory_space<vmem>>, %arg6: memref<2x16xf32, #tpu.memory_space<vmem>>, %arg7: memref<1x2x1xf32, #tpu.memory_space<vmem>>, %arg8: memref<1x2x1xf32, #tpu.memory_space<vmem>>, %arg9: memref<2x16xf32, #tpu.memory_space<vmem>>, %arg10: memref<2x16xf32, #tpu.memory_space<vmem>>) attributes {dimension_semantics = [#tpu.dimension_semantics<parallel>, #tpu.dimension_semantics<arbitrary>], iteration_bounds = array<i64: 1, 1>, scalar_prefetch = 0 : i64, scratch_operands = 2 : i64, tpu.core_type = #tpu.core_type<tc>, window_params = [{transform_indices = @transform_0, window_bounds = array<i64: 2, 8, 16>}, {transform_indices = @transform_1, window_bounds = array<i64: 2, 8, 16>}, {transform_indices = @transform_2, window_bounds = array<i64: 2, 8, 16>}, {transform_indices = @transform_3, window_bounds = array<i64: 2, 16>}, {transform_indices = @transform_4, window_bounds = array<i64: 2, 16>}, {transform_indices = @transform_5, window_bounds = array<i64: 1, 2, 1>}, {transform_indices = @transform_6, window_bounds = array<i64: 1, 2, 1>}]} {
    %c0_i32 = arith.constant 0 : i32
    %0 = arith.cmpi eq, %arg1, %c0_i32 : i32
    %1 = arith.extui %0 : i1 to i32
    %c0_i32_0 = arith.constant 0 : i32
    %2 = arith.cmpi ne, %1, %c0_i32_0 : i32
    scf.if %2 {
      %cst_29 = arith.constant 0.000000e+00 : f32
      %42 = vector.broadcast %cst_29 : f32 to vector<2x16xf32>
      %c0_30 = arith.constant 0 : index
      %c0_31 = arith.constant 0 : index
      %43 = vector.load %arg9[%c0_30, %c0_31] : memref<2x16xf32, #tpu.memory_space<vmem>>, vector<2x16xf32>
      tpu.vector_store %arg9[%c0_30, %c0_31], %42 {strides = array<i32>} : memref<2x16xf32, #tpu.memory_space<vmem>>, vector<2x16xf32>,
      %cst_32 = arith.constant 0.000000e+00 : f32
      %44 = vector.broadcast %cst_32 : f32 to vector<2x16xf32>
      %c0_33 = arith.constant 0 : index
      %c0_34 = arith.constant 0 : index
      %45 = vector.load %arg10[%c0_33, %c0_34] : memref<2x16xf32, #tpu.memory_space<vmem>>, vector<2x16xf32>
      tpu.vector_store %arg10[%c0_33, %c0_34], %44 {strides = array<i32>} : memref<2x16xf32, #tpu.memory_space<vmem>>, vector<2x16xf32>,
    } else {
    }
    %c0 = arith.constant 0 : index
    %c0_1 = arith.constant 0 : index
    %c0_2 = arith.constant 0 : index
    %3 = vector.load %arg4[%c0, %c0_1, %c0_2] : memref<2x8x16xf32, #tpu.memory_space<vmem>>, vector<2x8x16xf32>
    %c0_3 = arith.constant 0 : index
    %c0_4 = arith.constant 0 : index
    %c0_5 = arith.constant 0 : index
    %4 = vector.load %arg2[%c0_3, %c0_4, %c0_5] : memref<2x8x16xf32, #tpu.memory_space<vmem>>, vector<2x8x16xf32>
    %5 = arith.subf %4, %3 : vector<2x8x16xf32>
    %c0_6 = arith.constant 0 : index
    %c0_7 = arith.constant 0 : index
    %c0_8 = arith.constant 0 : index
    %6 = vector.load %arg3[%c0_6, %c0_7, %c0_8] : memref<2x8x16xf32, #tpu.memory_space<vmem>>, vector<2x8x16xf32>
    %7 = arith.subf %6, %3 : vector<2x8x16xf32>
    %8 = arith.mulf %5, %5 : vector<2x8x16xf32>
    %9 = arith.mulf %7, %7 : vector<2x8x16xf32>
    %10 = arith.addf %8, %9 : vector<2x8x16xf32>
    %cst = arith.constant dense<0.000000e+00> : vector<2x16xf32>
    %11 = vector.multi_reduction <add>, %10, %cst [1] : vector<2x8x16xf32> to vector<2x16xf32>
    %c0_9 = arith.constant 0 : index
    %c0_10 = arith.constant 0 : index
    %12 = vector.load %arg5[%c0_9, %c0_10] : memref<2x16xf32, #tpu.memory_space<vmem>>, vector<2x16xf32>
    %c0_11 = arith.constant 0 : index
    %c0_12 = arith.constant 0 : index
    %13 = vector.load %arg6[%c0_11, %c0_12] : memref<2x16xf32, #tpu.memory_space<vmem>>, vector<2x16xf32>
    %cst_13 = arith.constant 0.000000e+00 : f32
    %14 = vector.broadcast %cst_13 : f32 to vector<2x16xf32>
    %15 = arith.subf %14, %12 : vector<2x16xf32>
    %cst_14 = arith.constant 0.000000e+00 : f32
    %16 = vector.broadcast %cst_14 : f32 to vector<2x16xf32>
    %17 = arith.maximumf %15, %16 : vector<2x16xf32>
    %18 = math.absf %12 : vector<2x16xf32>
    %cst_15 = arith.constant 0.000000e+00 : f32
    %19 = vector.broadcast %cst_15 : f32 to vector<2x16xf32>
    %20 = arith.subf %19, %18 : vector<2x16xf32>
    %21 = math.exp %20 : vector<2x16xf32>
    %22 = math.log1p %21 : vector<2x16xf32>
    %23 = arith.addf %17, %22 : vector<2x16xf32>
    %cst_16 = arith.constant 1.000000e+00 : f32
    %24 = vector.broadcast %cst_16 : f32 to vector<2x16xf32>
    %25 = arith.subf %24, %13 : vector<2x16xf32>
    %26 = arith.mulf %25, %12 : vector<2x16xf32>
    %cst_17 = arith.constant 4.000000e+00 : f32
    %27 = vector.broadcast %cst_17 : f32 to vector<2x16xf32>
    %28 = arith.mulf %27, %13 : vector<2x16xf32>
    %cst_18 = arith.constant 1.000000e+00 : f32
    %29 = vector.broadcast %cst_18 : f32 to vector<2x16xf32>
    %30 = arith.addf %29, %28 : vector<2x16xf32>
    %31 = arith.mulf %30, %23 : vector<2x16xf32>
    %32 = arith.addf %26, %31 : vector<2x16xf32>
    %c0_19 = arith.constant 0 : index
    %c0_20 = arith.constant 0 : index
    %33 = vector.load %arg9[%c0_19, %c0_20] : memref<2x16xf32, #tpu.memory_space<vmem>>, vector<2x16xf32>
    %34 = arith.addf %33, %11 : vector<2x16xf32>
    %c0_21 = arith.constant 0 : index
    %c0_22 = arith.constant 0 : index
    %35 = vector.load %arg9[%c0_21, %c0_22] : memref<2x16xf32, #tpu.memory_space<vmem>>, vector<2x16xf32>
    tpu.vector_store %arg9[%c0_21, %c0_22], %34 {strides = array<i32>} : memref<2x16xf32, #tpu.memory_space<vmem>>, vector<2x16xf32>,
    %c0_23 = arith.constant 0 : index
    %c0_24 = arith.constant 0 : index
    %36 = vector.load %arg10[%c0_23, %c0_24] : memref<2x16xf32, #tpu.memory_space<vmem>>, vector<2x16xf32>
    %37 = arith.addf %36, %32 : vector<2x16xf32>
    %c0_25 = arith.constant 0 : index
    %c0_26 = arith.constant 0 : index
    %38 = vector.load %arg10[%c0_25, %c0_26] : memref<2x16xf32, #tpu.memory_space<vmem>>, vector<2x16xf32>
    tpu.vector_store %arg10[%c0_25, %c0_26], %37 {strides = array<i32>} : memref<2x16xf32, #tpu.memory_space<vmem>>, vector<2x16xf32>,
    %c0_i32_27 = arith.constant 0 : i32
    %39 = arith.cmpi eq, %arg1, %c0_i32_27 : i32
    %40 = arith.extui %39 : i1 to i32
    %c0_i32_28 = arith.constant 0 : i32
    %41 = arith.cmpi ne, %40, %c0_i32_28 : i32
    scf.if %41 {
      %c0_29 = arith.constant 0 : index
      %c0_30 = arith.constant 0 : index
      %42 = vector.load %arg9[%c0_29, %c0_30] : memref<2x16xf32, #tpu.memory_space<vmem>>, vector<2x16xf32>
      %cst_31 = arith.constant dense<0.000000e+00> : vector<2xf32>
      %43 = vector.multi_reduction <add>, %42, %cst_31 [1] : vector<2x16xf32> to vector<2xf32>
      %44 = vector.shape_cast %43 : vector<2xf32> to vector<2x1xf32>
      %cst_32 = arith.constant 7.812500e-03 : f32
      %45 = vector.broadcast %cst_32 : f32 to vector<2x1xf32>
      %46 = arith.mulf %44, %45 : vector<2x1xf32>
      %c0_33 = arith.constant 0 : index
      %c0_34 = arith.constant 0 : index
      %47 = vector.load %arg10[%c0_33, %c0_34] : memref<2x16xf32, #tpu.memory_space<vmem>>, vector<2x16xf32>
      %cst_35 = arith.constant dense<0.000000e+00> : vector<2xf32>
      %48 = vector.multi_reduction <add>, %47, %cst_35 [1] : vector<2x16xf32> to vector<2xf32>
      %49 = vector.shape_cast %48 : vector<2xf32> to vector<2x1xf32>
      %cst_36 = arith.constant 6.250000e-02 : f32
      %50 = vector.broadcast %cst_36 : f32 to vector<2x1xf32>
      %51 = arith.mulf %49, %50 : vector<2x1xf32>
      %52 = vector.shape_cast %46 : vector<2x1xf32> to vector<1x2x1xf32>
      %c0_37 = arith.constant 0 : index
      %c0_38 = arith.constant 0 : index
      %c0_39 = arith.constant 0 : index
      %53 = vector.load %arg7[%c0_37, %c0_38, %c0_39] : memref<1x2x1xf32, #tpu.memory_space<vmem>>, vector<1x2x1xf32>
      tpu.vector_store %arg7[%c0_37, %c0_38, %c0_39], %52 {strides = array<i32>} : memref<1x2x1xf32, #tpu.memory_space<vmem>>, vector<1x2x1xf32>,
      %54 = vector.shape_cast %51 : vector<2x1xf32> to vector<1x2x1xf32>
      %c0_40 = arith.constant 0 : index
      %c0_41 = arith.constant 0 : index
      %c0_42 = arith.constant 0 : index
      %55 = vector.load %arg8[%c0_40, %c0_41, %c0_42] : memref<1x2x1xf32, #tpu.memory_space<vmem>>, vector<1x2x1xf32>
      tpu.vector_store %arg8[%c0_40, %c0_41, %c0_42], %54 {strides = array<i32>} : memref<1x2x1xf32, #tpu.memory_space<vmem>>, vector<1x2x1xf32>,
    } else {
    }
    return
  }
  func.func @transform_0(%arg0: i32, %arg1: i32) -> (i32, i32, i32) {
    %c0_i32 = arith.constant 0 : i32
    %c0_i32_0 = arith.constant 0 : i32
    return %arg0, %c0_i32, %arg1 : i32, i32, i32
  }
  func.func @transform_1(%arg0: i32, %arg1: i32) -> (i32, i32, i32) {
    %c0_i32 = arith.constant 0 : i32
    %c0_i32_0 = arith.constant 0 : i32
    return %arg0, %c0_i32, %arg1 : i32, i32, i32
  }
  func.func @transform_2(%arg0: i32, %arg1: i32) -> (i32, i32, i32) {
    %c0_i32 = arith.constant 0 : i32
    %c0_i32_0 = arith.constant 0 : i32
    return %arg0, %c0_i32, %arg1 : i32, i32, i32
  }
  func.func @transform_3(%arg0: i32, %arg1: i32) -> (i32, i32) {
    %c0_i32 = arith.constant 0 : i32
    return %arg0, %arg1 : i32, i32
  }
  func.func @transform_4(%arg0: i32, %arg1: i32) -> (i32, i32) {
    %c0_i32 = arith.constant 0 : i32
    return %arg0, %arg1 : i32, i32
  }
  func.func @transform_5(%arg0: i32, %arg1: i32) -> (i32, i32, i32) {
    %c0_i32 = arith.constant 0 : i32
    %c0_i32_0 = arith.constant 0 : i32
    %c0_i32_1 = arith.constant 0 : i32
    return %arg0, %c0_i32, %c0_i32_0 : i32, i32, i32
  }
  func.func @transform_6(%arg0: i32, %arg1: i32) -> (i32, i32, i32) {
    %c0_i32 = arith.constant 0 : i32
    %c0_i32_0 = arith.constant 0 : i32
    %c0_i32_1 = arith.constant 0 : i32
    return %arg0, %c0_i32, %c0_i32_0 : i32, i32, i32
  }
}

</mosaic_0001>

<llo_original>
// kernel: tpu_custom_call.1
$region0: #{tpu_custom_call.1}
  #allocation0 [shape = 'u32[]', space=smem, size = 0x4, offset = 0x4, fixed_abs, tag = 'smem constant byte address 0x4 - core index']
  #allocation1 [shape = 'u32[144,128]{1,0:T(1,128)}', space=vmem, size = 0x12000, scoped, tag = 'internal scratch']
  #allocation2 [shape = 'f32[2,16]{1,0:T(2,128)}', space=vmem, size = 0x400, scoped, tag = 'scratch operand']
  #allocation3 [shape = 'f32[2,16]{1,0:T(2,128)}', space=vmem, size = 0x400, scoped, tag = 'scratch operand']
  %s0 = inlined_call_operand.hbm [shape: f32[2,8,16], index: 0, kind: input, shape index: {}]
  %s1 = inlined_call_operand.hbm [shape: f32[2,8,16], index: 1, kind: input, shape index: {}]
  %s2 = inlined_call_operand.hbm [shape: f32[2,8,16], index: 2, kind: input, shape index: {}]
  %s3 = inlined_call_operand.vmem [shape: f32[2,16], index: 3, kind: input, shape index: {}]
  %s4 = inlined_call_operand.vmem [shape: f32[2,16], index: 4, kind: input, shape index: {}]
  %s5 = inlined_call_operand.vmem [shape: f32[1,2,1], index: 5, kind: output, shape index: {0}]
  %s6 = inlined_call_operand.vmem [shape: f32[1,2,1], index: 6, kind: output, shape index: {1}]
  %7 = xla_tuple %s5, %s6
  %s8 = sld [smem:[#allocation0]]
  $region58: #{tpu_custom_call.1} parent=0
    _
  %s10 = ssub.s32 1, %s8
  %s11 = scalar_select 0, %s10, %s8
  $region1: #{tpu_custom_call.1} parent=0
    #allocation4 [shape = 'u8[8192]{0}', space=vmem, size = 0x2000, scoped, tag = 'input window, operand 0, single buffered']
    #allocation5 [shape = 's32[1]{0}', space=sflag, size = 0x4, scoped, tag = 'scoped memory for tpu_custom_call.1']
    #allocation6 [shape = 'u8[8192]{0}', space=vmem, size = 0x2000, scoped, tag = 'input window, operand 1, single buffered']
    #allocation7 [shape = 's32[1]{0}', space=sflag, size = 0x4, scoped, tag = 'scoped memory for tpu_custom_call.1']
    #allocation8 [shape = 'u8[8192]{0}', space=vmem, size = 0x2000, scoped, tag = 'input window, operand 2, single buffered']
    %12 = vsyncpa [#allocation5], 0
    %13 = vsyncpa [#allocation7], 0
    // Predicated region
    $region2: #{tpu_custom_call.1} parent=1 // pred_check
      _
    $region3: #{tpu_custom_call.1} parent=1 // pred_check_branch
      %15 = sbr.rel (0) target = $region5
    $region4: #{tpu_custom_call.1} parent=1 // pred_region
      %s17 = ssub.s32 256, 256
      %18 = vsyncadd [#allocation5], %s17
      %s19 = sshll.u32 [#allocation4], 4
      %s20 = int_to_ptr.vmem [resolvable:$true] %s19
      %25 = dma.hbm_to_vmem [thread:$0]  %s0, 256, %s20, [#allocation5], 128, 128, 8
    $region5: #{tpu_custom_call.1} parent=1 // pred_fallthru
      _
    // Predicated region
    $region6: #{tpu_custom_call.1} parent=1 // pred_check
      _
    $region7: #{tpu_custom_call.1} parent=1 // pred_check_branch
      %27 = sbr.rel (0) target = $region9
    $region8: #{tpu_custom_call.1} parent=1 // pred_region
      %s29 = ssub.s32 256, 256
      %30 = vsyncadd [#allocation7], %s29
      %s31 = sshll.u32 [#allocation6], 4
      %s32 = int_to_ptr.vmem [resolvable:$true] %s31
      %37 = dma.hbm_to_vmem [thread:$0]  %s1, 256, %s32, [#allocation7], 128, 128, 8
    $region9: #{tpu_custom_call.1} parent=1 // pred_fallthru
      _
    // Predicated region
    $region10: #{tpu_custom_call.1} parent=1 // pred_check
      _
    $region11: #{tpu_custom_call.1} parent=1 // pred_check_branch
      %39 = sbr.rel (0) target = $region13
    $region12: #{tpu_custom_call.1} parent=1 // pred_region
      %s41 = ssub.s32 256, 256
      %42 = vsyncadd [#allocation7], %s41
      %s43 = sshll.u32 [#allocation8], 4
      %s44 = int_to_ptr.vmem [resolvable:$true] %s43
      %49 = dma.hbm_to_vmem [thread:$0]  %s2, 256, %s44, [#allocation7], 128, 128, 8
    $region13: #{tpu_custom_call.1} parent=1 // pred_fallthru
      _
    // Predicated region
    $region14: #{tpu_custom_call.1} parent=1 // pred_check
      _
    $region15: #{tpu_custom_call.1} parent=1 // pred_check_branch
      %51 = sbr.rel (0) target = $region17
    $region16: #{tpu_custom_call.1} parent=1 // pred_region
      _
    $region17: #{tpu_custom_call.1} parent=1 // pred_fallthru
      _
    // Predicated region
    $region18: #{tpu_custom_call.1} parent=1 // pred_check
      _
    $region19: #{tpu_custom_call.1} parent=1 // pred_check_branch
      %53 = sbr.rel (0) target = $region21
    $region20: #{tpu_custom_call.1} parent=1 // pred_region
      _
    $region21: #{tpu_custom_call.1} parent=1 // pred_fallthru
      _
    // Predicated region
    $region22: #{tpu_custom_call.1} parent=1 // pred_check
      _
    $region23: #{tpu_custom_call.1} parent=1 // pred_check_branch
      %55 = sbr.rel (0) target = $region25
    $region24: #{tpu_custom_call.1} parent=1 // pred_region
      %56 = dma.done [#allocation5], 256
    $region25: #{tpu_custom_call.1} parent=1 // pred_fallthru
      _
    // Predicated region
    $region26: #{tpu_custom_call.1} parent=1 // pred_check
      _
    $region27: #{tpu_custom_call.1} parent=1 // pred_check_branch
      %58 = sbr.rel (0) target = $region29
    $region28: #{tpu_custom_call.1} parent=1 // pred_region
      %59 = dma.done [#allocation7], 256
    $region29: #{tpu_custom_call.1} parent=1 // pred_fallthru
      _
    // Predicated region
    $region30: #{tpu_custom_call.1} parent=1 // pred_check
      _
    $region31: #{tpu_custom_call.1} parent=1 // pred_check_branch
      %61 = sbr.rel (0) target = $region33
    $region32: #{tpu_custom_call.1} parent=1 // pred_region
      %62 = dma.done [#allocation7], 256
    $region33: #{tpu_custom_call.1} parent=1 // pred_fallthru
      _
    %p63 = scmp.eq.s32.totalorder 0, 0
    // Predicated region
    $region34: #{tpu_custom_call.1} parent=1 // pred_check
      %p64 = pneg %p63
    $region35: #{tpu_custom_call.1} parent=1 // pred_check_branch
      %66 = sbr.rel (%p64) target = $region37
    $region36: #{tpu_custom_call.1} parent=1 // pred_region
      %vm67 = vcmask 123904
      %68 = vst.msk [vmem:[#allocation2] sm:$0x3] %vm67, 0.0
      %69 = vst.msk [vmem:[#allocation3] sm:$0x3] %vm67, 0.0
    $region37: #{tpu_custom_call.1} parent=1 // pred_fallthru
      _
    %v70 = vld [vmem:[#allocation8] sm:$0xff]
    %v71 = vld [vmem:[#allocation8 + $0x8] sm:$0xff]
    %v72 = vld [vmem:[#allocation4] sm:$0xff]
    %v73 = vld [vmem:[#allocation4 + $0x8] sm:$0xff]
    %v74 = vsub.f32 %v72, %v70
    %v75 = vsub.f32 %v73, %v71
    %v76 = vld [vmem:[#allocation6] sm:$0xff]
    %v77 = vld [vmem:[#allocation6 + $0x8] sm:$0xff]
    %v78 = vsub.f32 %v76, %v70
    %v79 = vsub.f32 %v77, %v71
    %v80 = vmul.f32 %v74, %v74
    %v81 = vmul.f32 %v75, %v75
    %v82 = vmul.f32 %v78, %v78
    %v83 = vmul.f32 %v79, %v79
    %v84 = vadd.f32 %v80, %v82
    %v85 = vadd.f32 %v81, %v83
    %vm86 = vcmask 130048
    %v87 = vsel %vm86, %v84, 0.0
    %v88 = vrot.slane %v87, 4
    %v89 = vadd.f32 %v87, %v88
    %v90 = vrot.slane %v89, 2
    %v91 = vadd.f32 %v89, %v90
    %v92 = vrot.slane %v91, 1
    %v93 = vadd.f32 %v91, %v92
    %v94 = vsel %vm86, %v85, 0.0
    %v95 = vrot.slane %v94, 4
    %v96 = vadd.f32 %v94, %v95
    %v97 = vrot.slane %v96, 2
    %v98 = vadd.f32 %v96, %v97
    %v99 = vrot.slane %v98, 1
    %v100 = vadd.f32 %v98, %v99
    %v101 = vld [vmem:[%s3] sm:$0x3]
    %v102 = vld [vmem:[%s4] sm:$0x3]
    %v103 = vsub.f32 0.0, %v101
    %v104 = vmax.f32 %v103, 0.0
    %v105 = vand.u32 2147483647, %v101
    %v106 = vsub.f32 0.0, %v105
    %v107 = vmul.f32 %v106, 1.442695
    %v108 = vpow.pop %v107
    %v109 = vadd.f32 %v108, 1.0
    %v110 = vlog2.pop %v109
    %v111 = vmul.f32 %v110, 0.6931472
    %v112 = vmul.f32 -0.5, %v108
    %v113 = vadd.f32 %v112, 1.0
    %v114 = vmul.f32 %v113, %v108
    %v115 = vand.u32 2147483647, %v108
    %vm116 = vcmp.lt.f32.partialorder %v115, 0.0004427343
    %v117 = vsel %vm116, %v114, %v111
    %v118 = vadd.f32 %v104, %v117
    %v119 = vsub.f32 1.0, %v102
    %v120 = vmul.f32 %v119, %v101
    %v121 = vmul.f32 %v102, 4.0
    %v122 = vadd.f32 %v121, 1.0
    %v123 = vmul.f32 %v122, %v118
    %v124 = vadd.f32 %v120, %v123
    %v125 = vld [vmem:[#allocation2] sm:$0x3]
    %vm128 = vcmask 1041409
    %v129 = vsel %vm128, %v100, %v93
    %v131 = vadd.f32 %v125, %v129
    %vm132 = vcmask 123904
    %133 = vst.msk [vmem:[#allocation2] sm:$0x3] %vm132, %v131
    %v134 = vld [vmem:[#allocation3] sm:$0x3]
    %v135 = vadd.f32 %v134, %v124
    %136 = vst.msk [vmem:[#allocation3] sm:$0x3] %vm132, %v135
    // Predicated region
    $region38: #{tpu_custom_call.1} parent=1 // pred_check
      %p137 = pneg %p63
    $region39: #{tpu_custom_call.1} parent=1 // pred_check_branch
      %139 = sbr.rel (%p137) target = $region41
    $region40: #{tpu_custom_call.1} parent=1 // pred_region
      %v140 = vld [vmem:[#allocation2] sm:$0x3]
      %v141 = vsel %vm132, %v140, 0.0
      %142 = vadd.xlane.f32.xlu0 %v141
      %v143 = vpop.xlane.xlu0 %142
      %v144 = vmul.f32 %v143, 0.0078125
      %v145 = vld [vmem:[#allocation3] sm:$0x3]
      %v146 = vsel %vm132, %v145, 0.0
      %147 = vadd.xlane.f32.xlu0 %v146
      %v148 = vpop.xlane.xlu0 %147
      %v149 = vmul.f32 %v148, 0.0625
      %vm150 = vcmask 1024
      %151 = vst.msk [vmem:[%s5] sm:$0x3] %vm150, %v144
      %152 = vst.msk [vmem:[%s6] sm:$0x3] %vm150, %v149
    $region41: #{tpu_custom_call.1} parent=1 // pred_fallthru
      _
    // Predicated region
    $region42: #{tpu_custom_call.1} parent=1 // pred_check
      _
    $region43: #{tpu_custom_call.1} parent=1 // pred_check_branch
      %154 = sbr.rel (0) target = $region45
    $region44: #{tpu_custom_call.1} parent=1 // pred_region
      _
    $region45: #{tpu_custom_call.1} parent=1 // pred_fallthru
      _
    // Predicated region
    $region46: #{tpu_custom_call.1} parent=1 // pred_check
      _
    $region47: #{tpu_custom_call.1} parent=1 // pred_check_branch
      %156 = sbr.rel (0) target = $region49
    $region48: #{tpu_custom_call.1} parent=1 // pred_region
      _
    $region49: #{tpu_custom_call.1} parent=1 // pred_fallthru
      _
    // Predicated region
    $region50: #{tpu_custom_call.1} parent=1 // pred_check
      _
    $region51: #{tpu_custom_call.1} parent=1 // pred_check_branch
      %158 = sbr.rel (0) target = $region53
    $region52: #{tpu_custom_call.1} parent=1 // pred_region
      _
    $region53: #{tpu_custom_call.1} parent=1 // pred_fallthru
      _
    // Predicated region
    $region54: #{tpu_custom_call.1} parent=1 // pred_check
      _
    $region55: #{tpu_custom_call.1} parent=1 // pred_check_branch
      %160 = sbr.rel (0) target = $region57
    $region56: #{tpu_custom_call.1} parent=1 // pred_region
      _
    $region57: #{tpu_custom_call.1} parent=1 // pred_fallthru
      _
    %161 = vsyncpa [#allocation5], 1
    %162 = vsyncpa [#allocation7], 1

</llo_original>
